<compile_context>
chip_gen: v6e
topology: v6e:2x2x1
jax: 0.10.0
libtpu: 0.0.40
codegen_flags: <defaults>
</compile_context>

<pallas_src>
import jax
import jax.numpy as jnp
from jax.experimental import pallas as pl
from jax.experimental.pallas import tpu as pltpu


def _make_motif_2_3_kernel(H, W, C):
    HW = H * W
    taps = [(dy, dx) for dy in (-1, 0, 1) for dx in (-1, 0, 1)]

    def kernel(x_ref, w_dw_ref, w_pw_ref, shift_ref, o_ref):
        # x_ref    : (C, HW)  channels on sublanes, fused H*W on lanes
        # w_dw_ref : (C, 9)   depthwise 3x3 weights, tap t = 3*(dy+1)+(dx+1)
        # w_pw_ref : (C, C)   pointwise weights (BN scale folded), [c_out, c_in]
        # shift_ref: (C, 1)   folded BatchNorm shift
        # o_ref    : (C, HW)
        x = x_ref[...]

        # ---- border masks along the fused spatial axis (built once) --------
        pos = jax.lax.broadcasted_iota(jnp.int32, (C, HW), 1)
        if W & (W - 1) == 0:                       # power-of-two fast path
            row = jnp.right_shift(pos, W.bit_length() - 1)
            col = jnp.bitwise_and(pos, W - 1)
        else:
            row = pos // W
            col = pos - row * W
        row_lo = row >= 1          # a row above exists   (dy = -1 valid)
        row_hi = row <= H - 2      # a row below exists   (dy = +1 valid)
        col_lo = col >= 1          # a col to the left    (dx = -1 valid)
        col_hi = col <= W - 2      # a col to the right   (dx = +1 valid)

        masks = {
            (-1, -1): jnp.logical_and(row_lo, col_lo),
            (-1,  0): row_lo,
            (-1,  1): jnp.logical_and(row_lo, col_hi),
            ( 0, -1): col_lo,
            ( 0,  1): col_hi,
            ( 1, -1): jnp.logical_and(row_hi, col_lo),
            ( 1,  0): row_hi,
            ( 1,  1): jnp.logical_and(row_hi, col_hi),
        }

        # ---- 8 shifted copies via XLU rolls (shared by conv & pool) --------
        # shifted[(dy,dx)][p] == x[p + dy*W + dx]  (wrap-around masked later)
        shifted = {}
        for dy, dx in taps:
            off = dy * W + dx
            if off == 0:
                shifted[(dy, dx)] = x
            else:
                shifted[(dy, dx)] = pltpu.roll(x, (-off) % HW, axis=1)

        # ---- depthwise 3x3 conv: masked FMA over the 9 taps ----------------
        w_dw = w_dw_ref[...]                                 # (C, 9)
        acc = jnp.zeros((C, HW), jnp.float32)
        for t, (dy, dx) in enumerate(taps):
            w_t = w_dw[:, t:t + 1]                           # (C, 1)
            s = shifted[(dy, dx)]
            if (dy, dx) == (0, 0):
                acc = acc + s * w_t
            else:
                acc = acc + jnp.where(masks[(dy, dx)], s, 0.0) * w_t

        # ---- 3x3 max pool (padding=1), separable: H-max then V-max ---------
        neg = jnp.finfo(jnp.float32).min
        hmax = jnp.maximum(
            x,
            jnp.maximum(jnp.where(col_lo, shifted[(0, -1)], neg),
                        jnp.where(col_hi, shifted[(0, 1)], neg)))
        pooled = jnp.maximum(
            hmax,
            jnp.maximum(
                jnp.where(row_lo, pltpu.roll(hmax, W, axis=1), neg),
                jnp.where(row_hi, pltpu.roll(hmax, HW - W, axis=1), neg)))

        # ---- pointwise 1x1 conv on the MXU (BN scale folded in weights) ----
        pw = jnp.dot(w_pw_ref[...], acc,
                     preferred_element_type=jnp.float32,
                     precision=jax.lax.Precision.HIGHEST)

        y = jnp.maximum(pw + shift_ref[...], 0.0)            # BN shift + ReLU

        # motif_2_3 wiring: identity + (maxpool + conv branch)
        o_ref[...] = x + pooled + y

    return kernel


@jax.jit
def motif_2_3_forward(x_nchw, w_dw_oihw, w_pw_oihw, gamma, beta,
                      running_mean, running_var, eps=1e-5):
    """x_nchw: (N, C, H, W) float32. Returns (N, C, H, W) float32."""
    N, C, H, W = x_nchw.shape
    HW = H * W

    x = x_nchw.astype(jnp.float32).reshape(N, C, HW)          # lane-dense

    # Depthwise weight (C, 1, 3, 3) -> (C, 9), tap index t = 3*ky + kx.
    w_dw = w_dw_oihw.astype(jnp.float32)[:, 0, :, :].reshape(C, 9)

    # Fold BatchNorm scale into the pointwise weights; keep only the shift.
    inv_std = 1.0 / jnp.sqrt(running_var.astype(jnp.float32) + eps)
    scale = gamma.astype(jnp.float32) * inv_std                        # (C,)
    shift = beta.astype(jnp.float32) - running_mean.astype(jnp.float32) * scale
    w_pw = w_pw_oihw.astype(jnp.float32)[:, :, 0, 0] * scale[:, None]  # (C, C)
    shift2 = shift.reshape(C, 1)

    kernel = _make_motif_2_3_kernel(H, W, C)
    out = pl.pallas_call(
        kernel,
        out_shape=jax.ShapeDtypeStruct((N, C, HW), jnp.float32),
        grid_spec=pltpu.PrefetchScalarGridSpec(
            num_scalar_prefetch=0,
            grid=(N,),
            in_specs=[
                pl.BlockSpec((None, C, HW), lambda n: (n, 0, 0)),
                pl.BlockSpec((C, 9), lambda n: (0, 0)),
                pl.BlockSpec((C, C), lambda n: (0, 0)),
                pl.BlockSpec((C, 1), lambda n: (0, 0)),
            ],
            out_specs=pl.BlockSpec((None, C, HW), lambda n: (n, 0, 0)),
        ),
        # Reuse the input buffer for the output (each block is read fully
        # before the single final store, and no block is revisited).
        input_output_aliases={0: 0},
        compiler_params=pltpu.CompilerParams(
            dimension_semantics=("parallel",)),
    )(x, w_dw, w_pw, shift2)

    return out.reshape(N, C, H, W)


def motif_2_3_reference(x, w_dw, w_pw, gamma, beta, rm, rv, eps=1e-5):
    """Pure-JAX reference (NCHW), mirrors the PyTorch forward (eval mode)."""
    C = x.shape[1]
    dw = jax.lax.conv_general_dilated(
        x, w_dw, (1, 1), ((1, 1), (1, 1)),
        dimension_numbers=("NCHW", "OIHW", "NCHW"),
        feature_group_count=C, precision=jax.lax.Precision.HIGHEST)
    pw = jax.lax.conv_general_dilated(
        dw, w_pw, (1, 1), ((0, 0), (0, 0)),
        dimension_numbers=("NCHW", "OIHW", "NCHW"),
        precision=jax.lax.Precision.HIGHEST)
    scale = gamma / jnp.sqrt(rv + eps)
    shift = beta - rm * scale
    y = jnp.maximum(pw * scale[None, :, None, None]
                    + shift[None, :, None, None], 0.0)
    pooled = jax.lax.reduce_window(
        x, -jnp.inf, jax.lax.max, (1, 1, 3, 3), (1, 1, 1, 1),
        [(0, 0), (0, 0), (1, 1), (1, 1)])
    return x + pooled + y


if __name__ == "__main__":
    N, C, H, W = 2, 16, 16, 16      # c0 = 16 in the reference module
    key = jax.random.PRNGKey(0)
    kx, kdw, kpw, kg, kb, km, kv = jax.random.split(key, 7)

    x = jax.random.normal(kx, (N, C, H, W), jnp.float32)

    # Deterministic parameter init (shapes match the PyTorch module).
    w_dw = jax.random.normal(kdw, (C, 1, 3, 3), jnp.float32) * 0.2   # depthwise
    w_pw = jax.random.normal(kpw, (C, C, 1, 1), jnp.float32) * 0.2   # pointwise
    gamma = 1.0 + 0.1 * jax.random.normal(kg, (C,), jnp.float32)
    beta = 0.1 * jax.random.normal(kb, (C,), jnp.float32)
    running_mean = 0.1 * jax.random.normal(km, (C,), jnp.float32)
    running_var = jnp.abs(jax.random.normal(kv, (C,), jnp.float32)) + 0.5

    out = motif_2_3_forward(x, w_dw, w_pw, gamma, beta,
                            running_mean, running_var)
    out = jax.block_until_ready(out)

    ref = motif_2_3_reference(x, w_dw, w_pw, gamma, beta,
                              running_mean, running_var)
    ref = jax.block_until_ready(ref)

    assert out.shape == (N, C, H, W)
    assert jnp.allclose(out, ref, rtol=1e-4, atol=1e-4), (
        float(jnp.max(jnp.abs(out - ref))))

    print("KERNEL_OK")
</pallas_src>

<mosaic_0001>
module attributes {stable_mosaic.version = 11 : i64} {
  func.func @kernel(%arg0: i32, %arg1: memref<1x16x256xf32, #tpu.memory_space<vmem>>, %arg2: memref<16x9xf32, #tpu.memory_space<vmem>>, %arg3: memref<16x16xf32, #tpu.memory_space<vmem>>, %arg4: memref<16x1xf32, #tpu.memory_space<vmem>>, %arg5: memref<1x16x256xf32, #tpu.memory_space<vmem>>) attributes {dimension_semantics = [#tpu.dimension_semantics<parallel>], iteration_bounds = array<i64: 2>, scalar_prefetch = 0 : i64, scratch_operands = 0 : i64, tpu.core_type = #tpu.core_type<tc>, window_params = [{transform_indices = @transform_0, window_bounds = array<i64: 1, 16, 256>}, {pipeline_mode = #tpu.pipeline_mode<synchronous>, transform_indices = @transform_1, window_bounds = array<i64: 16, 9>}, {pipeline_mode = #tpu.pipeline_mode<synchronous>, transform_indices = @transform_2, window_bounds = array<i64: 16, 16>}, {pipeline_mode = #tpu.pipeline_mode<synchronous>, transform_indices = @transform_3, window_bounds = array<i64: 16, 1>}, {transform_indices = @transform_4, window_bounds = array<i64: 1, 16, 256>}]} {
    %c0 = arith.constant 0 : index
    %c0_0 = arith.constant 0 : index
    %c0_1 = arith.constant 0 : index
    %0 = vector.load %arg1[%c0, %c0_0, %c0_1] : memref<1x16x256xf32, #tpu.memory_space<vmem>>, vector<1x16x256xf32>
    %1 = vector.shape_cast %0 : vector<1x16x256xf32> to vector<16x256xf32>
    %2 = tpu.iota {dimensions = array<i32: 1>} : vector<16x256xi32>
    %c4_i32 = arith.constant 4 : i32
    %3 = vector.broadcast %c4_i32 : i32 to vector<16x256xi32>
    %4 = arith.shrsi %2, %3 : vector<16x256xi32>
    %c15_i32 = arith.constant 15 : i32
    %5 = vector.broadcast %c15_i32 : i32 to vector<16x256xi32>
    %6 = arith.andi %2, %5 : vector<16x256xi32>
    %c1_i32 = arith.constant 1 : i32
    %7 = vector.broadcast %c1_i32 : i32 to vector<16x256xi32>
    %8 = arith.cmpi sge, %4, %7 : vector<16x256xi32>
    %c14_i32 = arith.constant 14 : i32
    %9 = vector.broadcast %c14_i32 : i32 to vector<16x256xi32>
    %10 = arith.cmpi sle, %4, %9 : vector<16x256xi32>
    %c1_i32_2 = arith.constant 1 : i32
    %11 = vector.broadcast %c1_i32_2 : i32 to vector<16x256xi32>
    %12 = arith.cmpi sge, %6, %11 : vector<16x256xi32>
    %c14_i32_3 = arith.constant 14 : i32
    %13 = vector.broadcast %c14_i32_3 : i32 to vector<16x256xi32>
    %14 = arith.cmpi sle, %6, %13 : vector<16x256xi32>
    %15 = arith.andi %8, %12 : vector<16x256xi1>
    %16 = arith.andi %8, %14 : vector<16x256xi1>
    %17 = arith.andi %10, %12 : vector<16x256xi1>
    %18 = arith.andi %10, %14 : vector<16x256xi1>
    %c17_i32 = arith.constant 17 : i32
    %19 = tpu.dynamic_rotate %1 by %c17_i32 dim 1 : vector<16x256xf32>, i32 -> vector<16x256xf32>
    %c16_i32 = arith.constant 16 : i32
    %20 = tpu.dynamic_rotate %1 by %c16_i32 dim 1 : vector<16x256xf32>, i32 -> vector<16x256xf32>
    %c15_i32_4 = arith.constant 15 : i32
    %21 = tpu.dynamic_rotate %1 by %c15_i32_4 dim 1 : vector<16x256xf32>, i32 -> vector<16x256xf32>
    %c1_i32_5 = arith.constant 1 : i32
    %22 = tpu.dynamic_rotate %1 by %c1_i32_5 dim 1 : vector<16x256xf32>, i32 -> vector<16x256xf32>
    %c255_i32 = arith.constant 255 : i32
    %23 = tpu.dynamic_rotate %1 by %c255_i32 dim 1 : vector<16x256xf32>, i32 -> vector<16x256xf32>
    %c241_i32 = arith.constant 241 : i32
    %24 = tpu.dynamic_rotate %1 by %c241_i32 dim 1 : vector<16x256xf32>, i32 -> vector<16x256xf32>
    %c240_i32 = arith.constant 240 : i32
    %25 = tpu.dynamic_rotate %1 by %c240_i32 dim 1 : vector<16x256xf32>, i32 -> vector<16x256xf32>
    %c239_i32 = arith.constant 239 : i32
    %26 = tpu.dynamic_rotate %1 by %c239_i32 dim 1 : vector<16x256xf32>, i32 -> vector<16x256xf32>
    %c0_6 = arith.constant 0 : index
    %c0_7 = arith.constant 0 : index
    %27 = vector.load %arg2[%c0_6, %c0_7] : memref<16x9xf32, #tpu.memory_space<vmem>>, vector<16x9xf32>
    %cst = arith.constant 0.000000e+00 : f32
    %28 = vector.broadcast %cst : f32 to vector<16x256xf32>
    %29 = vector.extract_strided_slice %27 {offsets = [0, 0], sizes = [16, 1], strides = [1, 1]} : vector<16x9xf32> to vector<16x1xf32>
    %cst_8 = arith.constant 0.000000e+00 : f32
    %30 = vector.broadcast %cst_8 : f32 to vector<16x256xf32>
    %31 = arith.select %15, %19, %30 : vector<16x256xi1>, vector<16x256xf32>
    %32 = vector.broadcast %29 : vector<16x1xf32> to vector<16x256xf32>
    %33 = arith.mulf %31, %32 : vector<16x256xf32>
    %34 = arith.addf %28, %33 : vector<16x256xf32>
    %35 = vector.extract_strided_slice %27 {offsets = [0, 1], sizes = [16, 1], strides = [1, 1]} : vector<16x9xf32> to vector<16x1xf32>
    %cst_9 = arith.constant 0.000000e+00 : f32
    %36 = vector.broadcast %cst_9 : f32 to vector<16x256xf32>
    %37 = arith.select %8, %20, %36 : vector<16x256xi1>, vector<16x256xf32>
    %38 = vector.broadcast %35 : vector<16x1xf32> to vector<16x256xf32>
    %39 = arith.mulf %37, %38 : vector<16x256xf32>
    %40 = arith.addf %34, %39 : vector<16x256xf32>
    %41 = vector.extract_strided_slice %27 {offsets = [0, 2], sizes = [16, 1], strides = [1, 1]} : vector<16x9xf32> to vector<16x1xf32>
    %cst_10 = arith.constant 0.000000e+00 : f32
    %42 = vector.broadcast %cst_10 : f32 to vector<16x256xf32>
    %43 = arith.select %16, %21, %42 : vector<16x256xi1>, vector<16x256xf32>
    %44 = vector.broadcast %41 : vector<16x1xf32> to vector<16x256xf32>
    %45 = arith.mulf %43, %44 : vector<16x256xf32>
    %46 = arith.addf %40, %45 : vector<16x256xf32>
    %47 = vector.extract_strided_slice %27 {offsets = [0, 3], sizes = [16, 1], strides = [1, 1]} : vector<16x9xf32> to vector<16x1xf32>
    %cst_11 = arith.constant 0.000000e+00 : f32
    %48 = vector.broadcast %cst_11 : f32 to vector<16x256xf32>
    %49 = arith.select %12, %22, %48 : vector<16x256xi1>, vector<16x256xf32>
    %50 = vector.broadcast %47 : vector<16x1xf32> to vector<16x256xf32>
    %51 = arith.mulf %49, %50 : vector<16x256xf32>
    %52 = arith.addf %46, %51 : vector<16x256xf32>
    %53 = vector.extract_strided_slice %27 {offsets = [0, 4], sizes = [16, 1], strides = [1, 1]} : vector<16x9xf32> to vector<16x1xf32>
    %54 = vector.broadcast %53 : vector<16x1xf32> to vector<16x256xf32>
    %55 = arith.mulf %1, %54 : vector<16x256xf32>
    %56 = arith.addf %52, %55 : vector<16x256xf32>
    %57 = vector.extract_strided_slice %27 {offsets = [0, 5], sizes = [16, 1], strides = [1, 1]} : vector<16x9xf32> to vector<16x1xf32>
    %cst_12 = arith.constant 0.000000e+00 : f32
    %58 = vector.broadcast %cst_12 : f32 to vector<16x256xf32>
    %59 = arith.select %14, %23, %58 : vector<16x256xi1>, vector<16x256xf32>
    %60 = vector.broadcast %57 : vector<16x1xf32> to vector<16x256xf32>
    %61 = arith.mulf %59, %60 : vector<16x256xf32>
    %62 = arith.addf %56, %61 : vector<16x256xf32>
    %63 = vector.extract_strided_slice %27 {offsets = [0, 6], sizes = [16, 1], strides = [1, 1]} : vector<16x9xf32> to vector<16x1xf32>
    %cst_13 = arith.constant 0.000000e+00 : f32
    %64 = vector.broadcast %cst_13 : f32 to vector<16x256xf32>
    %65 = arith.select %17, %24, %64 : vector<16x256xi1>, vector<16x256xf32>
    %66 = vector.broadcast %63 : vector<16x1xf32> to vector<16x256xf32>
    %67 = arith.mulf %65, %66 : vector<16x256xf32>
    %68 = arith.addf %62, %67 : vector<16x256xf32>
    %69 = vector.extract_strided_slice %27 {offsets = [0, 7], sizes = [16, 1], strides = [1, 1]} : vector<16x9xf32> to vector<16x1xf32>
    %cst_14 = arith.constant 0.000000e+00 : f32
    %70 = vector.broadcast %cst_14 : f32 to vector<16x256xf32>
    %71 = arith.select %10, %25, %70 : vector<16x256xi1>, vector<16x256xf32>
    %72 = vector.broadcast %69 : vector<16x1xf32> to vector<16x256xf32>
    %73 = arith.mulf %71, %72 : vector<16x256xf32>
    %74 = arith.addf %68, %73 : vector<16x256xf32>
    %75 = vector.extract_strided_slice %27 {offsets = [0, 8], sizes = [16, 1], strides = [1, 1]} : vector<16x9xf32> to vector<16x1xf32>
    %cst_15 = arith.constant 0.000000e+00 : f32
    %76 = vector.broadcast %cst_15 : f32 to vector<16x256xf32>
    %77 = arith.select %18, %26, %76 : vector<16x256xi1>, vector<16x256xf32>
    %78 = vector.broadcast %75 : vector<16x1xf32> to vector<16x256xf32>
    %79 = arith.mulf %77, %78 : vector<16x256xf32>
    %80 = arith.addf %74, %79 : vector<16x256xf32>
    %cst_16 = arith.constant -3.40282347E+38 : f32
    %81 = vector.broadcast %cst_16 : f32 to vector<16x256xf32>
    %82 = arith.select %12, %22, %81 : vector<16x256xi1>, vector<16x256xf32>
    %cst_17 = arith.constant -3.40282347E+38 : f32
    %83 = vector.broadcast %cst_17 : f32 to vector<16x256xf32>
    %84 = arith.select %14, %23, %83 : vector<16x256xi1>, vector<16x256xf32>
    %85 = arith.maximumf %82, %84 : vector<16x256xf32>
    %86 = arith.maximumf %1, %85 : vector<16x256xf32>
    %c16_i32_18 = arith.constant 16 : i32
    %87 = tpu.dynamic_rotate %86 by %c16_i32_18 dim 1 : vector<16x256xf32>, i32 -> vector<16x256xf32>
    %cst_19 = arith.constant -3.40282347E+38 : f32
    %88 = vector.broadcast %cst_19 : f32 to vector<16x256xf32>
    %89 = arith.select %8, %87, %88 : vector<16x256xi1>, vector<16x256xf32>
    %c240_i32_20 = arith.constant 240 : i32
    %90 = tpu.dynamic_rotate %86 by %c240_i32_20 dim 1 : vector<16x256xf32>, i32 -> vector<16x256xf32>
    %cst_21 = arith.constant -3.40282347E+38 : f32
    %91 = vector.broadcast %cst_21 : f32 to vector<16x256xf32>
    %92 = arith.select %10, %90, %91 : vector<16x256xi1>, vector<16x256xf32>
    %93 = arith.maximumf %89, %92 : vector<16x256xf32>
    %94 = arith.maximumf %86, %93 : vector<16x256xf32>
    %c0_22 = arith.constant 0 : index
    %c0_23 = arith.constant 0 : index
    %95 = vector.load %arg3[%c0_22, %c0_23] : memref<16x16xf32, #tpu.memory_space<vmem>>, vector<16x16xf32>
    %cst_24 = arith.constant dense<0.000000e+00> : vector<16x256xf32>
    %96 = tpu.matmul %95, %80, %cst_24 {dimension_numbers = #tpu.dot_dimension_numbers<[1], [0], [0], [1], [0, 0, 1, 1], [], []>, precision = #tpu.contract_precision<fp32>} : vector<16x16xf32>, vector<16x256xf32>, vector<16x256xf32> -> vector<16x256xf32>
    %c0_25 = arith.constant 0 : index
    %c0_26 = arith.constant 0 : index
    %97 = vector.load %arg4[%c0_25, %c0_26] : memref<16x1xf32, #tpu.memory_space<vmem>>, vector<16x1xf32>
    %98 = vector.broadcast %97 : vector<16x1xf32> to vector<16x256xf32>
    %99 = arith.addf %96, %98 : vector<16x256xf32>
    %cst_27 = arith.constant 0.000000e+00 : f32
    %100 = vector.broadcast %cst_27 : f32 to vector<16x256xf32>
    %101 = arith.maximumf %99, %100 : vector<16x256xf32>
    %102 = arith.addf %1, %94 : vector<16x256xf32>
    %103 = arith.addf %102, %101 : vector<16x256xf32>
    %c0_28 = arith.constant 0 : index
    %c0_29 = arith.constant 0 : index
    %c0_30 = arith.constant 0 : index
    %104 = vector.load %arg5[%c0_28, %c0_29, %c0_30] : memref<1x16x256xf32, #tpu.memory_space<vmem>>, vector<1x16x256xf32>
    %105 = vector.shape_cast %104 : vector<1x16x256xf32> to vector<16x256xf32>
    %106 = vector.shape_cast %103 : vector<16x256xf32> to vector<1x16x256xf32>
    tpu.vector_store %arg5[%c0_28, %c0_29, %c0_30], %106 {strides = array<i32>} : memref<1x16x256xf32, #tpu.memory_space<vmem>>, vector<1x16x256xf32>,
    return
  }
  func.func @transform_0(%arg0: i32) -> (i32, i32, i32) {
    %c0_i32 = arith.constant 0 : i32
    %c0_i32_0 = arith.constant 0 : i32
    %c0_i32_1 = arith.constant 0 : i32
    return %arg0, %c0_i32, %c0_i32_0 : i32, i32, i32
  }
  func.func @transform_1(%arg0: i32) -> (i32, i32) {
    %c0_i32 = arith.constant 0 : i32
    %c0_i32_0 = arith.constant 0 : i32
    %c0_i32_1 = arith.constant 0 : i32
    return %c0_i32, %c0_i32_0 : i32, i32
  }
  func.func @transform_2(%arg0: i32) -> (i32, i32) {
    %c0_i32 = arith.constant 0 : i32
    %c0_i32_0 = arith.constant 0 : i32
    %c0_i32_1 = arith.constant 0 : i32
    return %c0_i32, %c0_i32_0 : i32, i32
  }
  func.func @transform_3(%arg0: i32) -> (i32, i32) {
    %c0_i32 = arith.constant 0 : i32
    %c0_i32_0 = arith.constant 0 : i32
    %c0_i32_1 = arith.constant 0 : i32
    return %c0_i32, %c0_i32_0 : i32, i32
  }
  func.func @transform_4(%arg0: i32) -> (i32, i32, i32) {
    %c0_i32 = arith.constant 0 : i32
    %c0_i32_0 = arith.constant 0 : i32
    %c0_i32_1 = arith.constant 0 : i32
    return %arg0, %c0_i32, %c0_i32_0 : i32, i32, i32
  }
}

</mosaic_0001>

<llo_original>
// kernel: squeeze.2
$region0: #{squeeze.2}
  %s0 = inlined_call_operand.vmem [shape: f32[16,3,3], index: 0, kind: input, shape index: {}]
  %s1 = inlined_call_operand.vmem [shape: f32[16,9], index: 1, kind: output, shape index: {}]
  $region1: #{squeeze.2} parent=0
    #allocation0 [shape = 'u8[12288]{0}', space=vmem, size = 0x3000, scoped, tag = 'scoped mem for input reshape']
    %s3 = sshll.u32 1, 4
    %s4 = ssub.s32 %s3, 1
    %s5 = smul.addr 4, 2
    %s6 = scalar_lea.vmem %s0, %s5
    %v7 = vld [vmem:[%s6] sm:%s4]
    %s8 = scalar_lea.vmem [#allocation0], 16
    %9 = vst [vmem:[%s8] sm:%s4] %v7
    %s10 = scalar_lea.vmem %s0, 4
    %v11 = vld [vmem:[%s10] sm:%s4]
    %s12 = scalar_lea.vmem [#allocation0], 8
    %13 = vst [vmem:[%s12] sm:%s4] %v11
    %v14 = vld [vmem:[%s0] sm:%s4]
    %15 = vst [vmem:[#allocation0] sm:%s4] %v14
    %v16 = vld [vmem:[#allocation0] sm:$0x7]
    %vm17 = vcmask 130048
    %18 = vst.msk [vmem:[%s1] sm:$0x7] %vm17, %v16
    %s19 = scalar_lea.vmem [#allocation0], 8
    %v20 = vld [vmem:[%s19] sm:$0x7]
    %vm21 = vcmask 130048
    %s22 = scalar_lea.vmem %s1, 3
    %23 = vst.msk [vmem:[%s22] sm:$0x7] %vm21, %v20
    %s24 = scalar_lea.vmem [#allocation0], 16
    %v25 = vld [vmem:[%s24] sm:$0x7]
    %vm26 = vcmask 130048
    %s27 = scalar_lea.vmem %s1, 6
    %28 = vst.msk [vmem:[%s27] sm:$0x7] %vm26, %v25

// kernel: motif_2_3_forward.1
$region0: #{motif_2_3_forward.1}
  #allocation0 [shape = 'u32[]', space=smem, size = 0x4, offset = 0x4, fixed_abs, tag = 'smem constant byte address 0x4 - core index']
  #allocation1 [shape = 'u32[144,128]{1,0:T(1,128)}', space=vmem, size = 0x12000, scoped, tag = 'internal scratch']
  %s0 = inlined_call_operand.vmem [shape: f32[2,16,256], index: 0, kind: input, shape index: {}, may-alias: {0,4}]
  %s1 = inlined_call_operand.vmem [shape: f32[16,9], index: 1, kind: input, shape index: {}]
  %s2 = inlined_call_operand.vmem [shape: f32[16,16], index: 2, kind: input, shape index: {}]
  %s3 = inlined_call_operand.vmem [shape: f32[16,1], index: 3, kind: input, shape index: {}]
  %s4 = inlined_call_operand.vmem [shape: f32[2,16,256], index: 4, kind: output, shape index: {}, may-alias: {0,4}]
  %s5 = sld [smem:[#allocation0]]
  $region49: #{motif_2_3_forward.1} parent=0
    _
  %s7 = ssub.s32 1, %s5
  %s8 = scalar_select 0, %s7, %s5
  loop: start=0, step=1, limit=4
  $region2: #{motif_2_3_forward.1} parent=0 // loop_pre_header
    _
  $region3: #{motif_2_3_forward.1} parent=0 // loop_header
    %s10 = sphi 0, %s14
    %p11 = scmp.ge.s32.totalorder %s10, 4
    %s20 = sphi 0, %s22
    %s23 = sphi 0, %s20
    %s24 = sphi 0, %s23
    %s40 = sphi 0, %s24
    %s44 = sphi 0, %s44
    %s46 = sphi 0, %s44
    %s47 = sphi 0, %s46
    %s61 = sphi 0, %s47
    %s65 = sphi 0, %s65
    %s67 = sphi 0, %s65
    %s68 = sphi 0, %s67
    %s82 = sphi 0, %s68
    %s86 = sphi 0, %s86
    %s88 = sphi 0, %s86
    %s89 = sphi 0, %s88
    %s103 = sphi 0, %s89
    %s109 = sphi 0, %s111
    %s112 = sphi 0, %s109
    %s113 = sphi 0, %s112
    %s129 = sphi 0, %s113
  $region4: #{motif_2_3_forward.1} parent=0 // loop_header_branch
    %13 = sbr.rel (%p11) target = $region8
  $region5: #{motif_2_3_forward.1} parent=0 // loop_body
    %s15 = ssub.s32 %s10, 1
    %s16 = ssub.s32 %s10, 2
    %s17 = sadd.s32 %s10, 1
    %s18 = ssub.s32 %s10, %s17
    %p19 = scmp.eq.s32.totalorder %s18, 0
    %s21 = sadd.s32 %s20, 1
    %s22 = scalar_select %p19, %s20, %s21
    %p25 = pneg %p19
    %p26 = scmp.eq.s32.totalorder %s10, 1
    %p27 = por %p25, %p26
    %p28 = scmp.ne.s32.totalorder %s20, %s23
    %p29 = scmp.eq.s32.totalorder %s10, 0
    %p30 = por %p28, %p29
    %p31 = scmp.ne.s32.totalorder %s20, %s23
    %p32 = scmp.eq.s32.totalorder %s15, 1
    %p33 = por %p31, %p32
    %p34 = scmp.ne.s32.totalorder %s23, %s24
    %p35 = scmp.eq.s32.totalorder %s15, 0
    %p36 = por %p34, %p35
    %p37 = scmp.ne.s32.totalorder %s23, %s24
    %p38 = scmp.eq.s32.totalorder %s16, 1
    %p39 = por %p37, %p38
    %p41 = scmp.ne.s32.totalorder %s24, %s40
    %p42 = scmp.eq.s32.totalorder %s16, 0
    %p43 = por %p41, %p42
    %s45 = sadd.s32 %s44, 1
    %p48 = scmp.eq.s32.totalorder %s10, 1
    %p49 = scmp.ne.s32.totalorder %s44, %s46
    %p50 = scmp.eq.s32.totalorder %s10, 0
    %p51 = por %p49, %p50
    %p52 = scmp.ne.s32.totalorder %s44, %s46
    %p53 = scmp.eq.s32.totalorder %s15, 1
    %p54 = por %p52, %p53
    %p55 = scmp.ne.s32.totalorder %s46, %s47
    %p56 = scmp.eq.s32.totalorder %s15, 0
    %p57 = por %p55, %p56
    %p58 = scmp.ne.s32.totalorder %s46, %s47
    %p59 = scmp.eq.s32.totalorder %s16, 1
    %p60 = por %p58, %p59
    %p62 = scmp.ne.s32.totalorder %s47, %s61
    %p63 = scmp.eq.s32.totalorder %s16, 0
    %p64 = por %p62, %p63
    %s66 = sadd.s32 %s65, 1
    %p69 = scmp.eq.s32.totalorder %s10, 1
    %p70 = scmp.ne.s32.totalorder %s65, %s67
    %p71 = scmp.eq.s32.totalorder %s10, 0
    %p72 = por %p70, %p71
    %p73 = scmp.ne.s32.totalorder %s65, %s67
    %p74 = scmp.eq.s32.totalorder %s15, 1
    %p75 = por %p73, %p74
    %p76 = scmp.ne.s32.totalorder %s67, %s68
    %p77 = scmp.eq.s32.totalorder %s15, 0
    %p78 = por %p76, %p77
    %p79 = scmp.ne.s32.totalorder %s67, %s68
    %p80 = scmp.eq.s32.totalorder %s16, 1
    %p81 = por %p79, %p80
    %p83 = scmp.ne.s32.totalorder %s68, %s82
    %p84 = scmp.eq.s32.totalorder %s16, 0
    %p85 = por %p83, %p84
    %s87 = sadd.s32 %s86, 1
    %p90 = scmp.eq.s32.totalorder %s10, 1
    %p91 = scmp.ne.s32.totalorder %s86, %s88
    %p92 = scmp.eq.s32.totalorder %s10, 0
    %p93 = por %p91, %p92
    %p94 = scmp.ne.s32.totalorder %s86, %s88
    %p95 = scmp.eq.s32.totalorder %s15, 1
    %p96 = por %p94, %p95
    %p97 = scmp.ne.s32.totalorder %s88, %s89
    %p98 = scmp.eq.s32.totalorder %s15, 0
    %p99 = por %p97, %p98
    %p100 = scmp.ne.s32.totalorder %s88, %s89
    %p101 = scmp.eq.s32.totalorder %s16, 1
    %p102 = por %p100, %p101
    %p104 = scmp.ne.s32.totalorder %s89, %s103
    %p105 = scmp.eq.s32.totalorder %s16, 0
    %p106 = por %p104, %p105
    %s107 = ssub.s32 %s10, %s17
    %p108 = scmp.eq.s32.totalorder %s107, 0
    %s110 = sadd.s32 %s109, 1
    %s111 = scalar_select %p108, %s109, %s110
    %p114 = pneg %p108
    %p115 = scmp.eq.s32.totalorder %s10, 1
    %p116 = por %p114, %p115
    %p117 = scmp.ne.s32.totalorder %s109, %s112
    %p118 = scmp.eq.s32.totalorder %s10, 0
    %p119 = por %p117, %p118
    %p120 = scmp.ne.s32.totalorder %s109, %s112
    %p121 = scmp.eq.s32.totalorder %s15, 1
    %p122 = por %p120, %p121
    %p123 = scmp.ne.s32.totalorder %s112, %s113
    %p124 = scmp.eq.s32.totalorder %s15, 0
    %p125 = por %p123, %p124
    %p126 = scmp.ne.s32.totalorder %s112, %s113
    %p127 = scmp.eq.s32.totalorder %s16, 1
    %p128 = por %p126, %p127
    %p130 = scmp.ne.s32.totalorder %s113, %s129
    %p131 = scmp.eq.s32.totalorder %s16, 0
    %p132 = por %p130, %p131
    %p133 = scmp.le.s32.totalorder 1, %s10
    %p134 = scmp.lt.s32.totalorder %s10, 3
    %p135 = pnand %p133, %p134
    %p136 = pneg %p135
    // Predicated region
    $region9: #{motif_2_3_forward.1} parent=5 // pred_check
      _
    $region10: #{motif_2_3_forward.1} parent=5 // pred_check_branch
      %138 = sbr.rel (%p135) target = $region12
    $region11: #{motif_2_3_forward.1} parent=5 // pred_region
      %s139 = ssub.s32 %s10, 1
      // Predicated region
      $region13: #{motif_2_3_forward.1} parent=11 // pred_check
        %p140 = pneg %p57
      $region14: #{motif_2_3_forward.1} parent=11 // pred_check_branch
        %142 = sbr.rel (%p140) target = $region16
      $region15: #{motif_2_3_forward.1} parent=11 // pred_region
        _
      $region16: #{motif_2_3_forward.1} parent=11 // pred_fallthru
        _
      // Predicated region
      $region17: #{motif_2_3_forward.1} parent=11 // pred_check
        %p143 = pneg %p78
      $region18: #{motif_2_3_forward.1} parent=11 // pred_check_branch
        %145 = sbr.rel (%p143) target = $region20
      $region19: #{motif_2_3_forward.1} parent=11 // pred_region
        _
      $region20: #{motif_2_3_forward.1} parent=11 // pred_fallthru
        _
      // Predicated region
      $region21: #{motif_2_3_forward.1} parent=11 // pred_check
        %p146 = pneg %p99
      $region22: #{motif_2_3_forward.1} parent=11 // pred_check_branch
        %148 = sbr.rel (%p146) target = $region24
      $region23: #{motif_2_3_forward.1} parent=11 // pred_region
        _
      $region24: #{motif_2_3_forward.1} parent=11 // pred_fallthru
        _
    $region12: #{motif_2_3_forward.1} parent=5 // pred_fallthru
      _
    %p149 = scmp.lt.s32.totalorder %s10, 2
    // Predicated region
    $region25: #{motif_2_3_forward.1} parent=5 // pred_check
      %p150 = pneg %p149
    $region26: #{motif_2_3_forward.1} parent=5 // pred_check_branch
      %152 = sbr.rel (%p150) target = $region28
    $region27: #{motif_2_3_forward.1} parent=5 // pred_region
      // Predicated region
      $region29: #{motif_2_3_forward.1} parent=27 // pred_check
        %p153 = pneg %p30
      $region30: #{motif_2_3_forward.1} parent=27 // pred_check_branch
        %155 = sbr.rel (%p153) target = $region32
      $region31: #{motif_2_3_forward.1} parent=27 // pred_region
        %p156 = scmp.lt.s32.totalorder %s10, 1
        %s157 = scalar_select %p156, %s10, 1
        %s158 = smul.addr %s157, 4
        %s159 = smul.addr %s158, 8
        %s160 = scalar_lea.vmem %s0, %s159
      $region32: #{motif_2_3_forward.1} parent=27 // pred_fallthru
        _
    $region28: #{motif_2_3_forward.1} parent=5 // pred_fallthru
      _
    %p161 = scmp.le.s32.totalorder 1, %s10
    %p162 = scmp.lt.s32.totalorder %s10, 3
    %p163 = pnand %p161, %p162
    %p164 = pneg %p163
    // Predicated region
    $region33: #{motif_2_3_forward.1} parent=5 // pred_check
      _
    $region34: #{motif_2_3_forward.1} parent=5 // pred_check_branch
      %166 = sbr.rel (%p163) target = $region36
    $region35: #{motif_2_3_forward.1} parent=5 // pred_region
      %s167 = ssub.s32 %s10, 1
      %p168 = scmp.lt.s32.totalorder %s15, 1
      %s169 = scalar_select %p168, %s15, 1
      %s170 = smul.addr %s169, 4
      %s171 = smul.addr %s170, 8
      %s172 = scalar_lea.vmem %s0, %s171
      %p173 = pneg %p36
      %p174 = pneg %p33
      %p175 = pneg %p57
      %p176 = pneg %p54
      %p177 = pneg %p78
      %p178 = pneg %p75
      %p179 = pneg %p99
      %p180 = pneg %p96
      %p181 = pneg %p125
      %p182 = pneg %p122
      %p183 = scmp.lt.s32.totalorder %s15, 1
      %s184 = scalar_select %p183, %s15, 1
      %s185 = smul.addr %s184, 4
      %s186 = smul.addr %s185, 8
      %s187 = scalar_lea.vmem %s4, %s186
      %p188 = scmp.lt.s32.totalorder %s15, 1
      %s189 = scalar_select %p188, %s15, 1
      %s190 = smul.addr %s189, 4
      %s191 = smul.addr %s190, 8
      %s192 = scalar_lea.vmem %s0, %s191
      %p193 = scmp.lt.s32.totalorder %s15, 1
      %s194 = scalar_select %p193, %s15, 1
      %s195 = smul.addr %s194, 4
      %s196 = smul.addr %s195, 8
      %s197 = scalar_lea.vmem %s4, %s196
      %v198 = vld [vmem:[%s192] sm:$0xff]
      %v199 = vld [vmem:[%s192 + $0x8] sm:$0xff]
      %v200 = vld [vmem:[%s192 + $0x10] sm:$0xff]
      %v201 = vld [vmem:[%s192 + $0x18] sm:$0xff]
      %v202 = vlaneseq
      %v203 = vand.u32 %v202, 127
      %v204 = vadd.s32 %v203, 128
      %v205 = vshra.s32 %v203, 4
      %v206 = vshra.s32 %v204, 4
      %v207 = vand.u32 %v203, 15
      %v208 = vand.u32 %v204, 15
      %vm209 = vcmp.ge.s32.totalorder %v205, 1
      %vm210 = vcmp.ge.s32.totalorder %v206, 1
      %vm211 = vcmp.le.s32.totalorder %v205, 14
      %vm212 = vcmp.le.s32.totalorder %v206, 14
      %vm213 = vcmp.ge.s32.totalorder %v207, 1
      %vm214 = vcmp.ge.s32.totalorder %v208, 1
      %vm215 = vcmp.le.s32.totalorder %v207, 14
      %vm216 = vcmp.le.s32.totalorder %v208, 14
      %vm217 = vmand %vm209, %vm213
      %vm218 = vmand %vm210, %vm214
      %vm219 = vmand %vm209, %vm215
      %vm220 = vmand %vm210, %vm216
      %vm221 = vmand %vm211, %vm213
      %vm222 = vmand %vm212, %vm214
      %vm223 = vmand %vm211, %vm215
      %vm224 = vmand %vm212, %vm216
      %225 = vrot.lane.b32.xlu0 %v198, 17
      %v226 = vpop.permute.xlu0 %225
      %227 = vrot.lane.b32.xlu0 %v200, 17
      %v228 = vpop.permute.xlu0 %227
      %229 = vrot.lane.b32.xlu0 %v199, 17
      %v230 = vpop.permute.xlu0 %229
      %231 = vrot.lane.b32.xlu0 %v201, 17
      %v232 = vpop.permute.xlu0 %231
      %vm233 = vcmp.lt.s32.totalorder %v203, 17
      %v234 = vsel %vm233, %v226, %v230
      %v235 = vsel %vm233, %v228, %v232
      %v236 = vsel %vm233, %v230, %v226
      %v237 = vsel %vm233, %v232, %v228
      %238 = vrot.lane.b32.xlu0 %v198, 16
      %v239 = vpop.permute.xlu0 %238
      %240 = vrot.lane.b32.xlu0 %v200, 16
      %v241 = vpop.permute.xlu0 %240
      %242 = vrot.lane.b32.xlu0 %v199, 16
      %v243 = vpop.permute.xlu0 %242
      %244 = vrot.lane.b32.xlu0 %v201, 16
      %v245 = vpop.permute.xlu0 %244
      %vm246 = vcmp.lt.s32.totalorder %v203, 16
      %v247 = vsel %vm246, %v239, %v243
      %v248 = vsel %vm246, %v241, %v245
      %v249 = vsel %vm246, %v243, %v239
      %v250 = vsel %vm246, %v245, %v241
      %251 = vrot.lane.b32.xlu0 %v198, 15
      %v252 = vpop.permute.xlu0 %251
      %253 = vrot.lane.b32.xlu0 %v200, 15
      %v254 = vpop.permute.xlu0 %253
      %255 = vrot.lane.b32.xlu0 %v199, 15
      %v256 = vpop.permute.xlu0 %255
      %257 = vrot.lane.b32.xlu0 %v201, 15
      %v258 = vpop.permute.xlu0 %257
      %vm259 = vcmp.lt.s32.totalorder %v203, 15
      %v260 = vsel %vm259, %v252, %v256
      %v261 = vsel %vm259, %v254, %v258
      %v262 = vsel %vm259, %v256, %v252
      %v263 = vsel %vm259, %v258, %v254
      %264 = vrot.lane.b32.xlu0 %v198, 1
      %v265 = vpop.permute.xlu0 %264
      %266 = vrot.lane.b32.xlu0 %v200, 1
      %v267 = vpop.permute.xlu0 %266
      %268 = vrot.lane.b32.xlu0 %v199, 1
      %v269 = vpop.permute.xlu0 %268
      %270 = vrot.lane.b32.xlu0 %v201, 1
      %v271 = vpop.permute.xlu0 %270
      %vm272 = vcmp.lt.s32.totalorder %v203, 1
      %v273 = vsel %vm272, %v265, %v269
      %v274 = vsel %vm272, %v267, %v271
      %v275 = vsel %vm272, %v269, %v265
      %v276 = vsel %vm272, %v271, %v267
      %277 = vrot.lane.b32.xlu0 %v198, 127
      %v278 = vpop.permute.xlu0 %277
      %279 = vrot.lane.b32.xlu0 %v200, 127
      %v280 = vpop.permute.xlu0 %279
      %281 = vrot.lane.b32.xlu0 %v199, 127
      %v282 = vpop.permute.xlu0 %281
      %283 = vrot.lane.b32.xlu0 %v201, 127
      %v284 = vpop.permute.xlu0 %283
      %vm285 = vcmp.lt.s32.totalorder %v203, 127
      %v286 = vsel %vm285, %v278, %v282
      %v287 = vsel %vm285, %v280, %v284
      %v288 = vsel %vm285, %v282, %v278
      %v289 = vsel %vm285, %v284, %v280
      %290 = vrot.lane.b32.xlu0 %v198, 113
      %v291 = vpop.permute.xlu0 %290
      %292 = vrot.lane.b32.xlu0 %v200, 113
      %v293 = vpop.permute.xlu0 %292
      %294 = vrot.lane.b32.xlu0 %v199, 113
      %v295 = vpop.permute.xlu0 %294
      %296 = vrot.lane.b32.xlu0 %v201, 113
      %v297 = vpop.permute.xlu0 %296
      %vm298 = vcmp.lt.s32.totalorder %v203, 113
      %v299 = vsel %vm298, %v291, %v295
      %v300 = vsel %vm298, %v293, %v297
      %v301 = vsel %vm298, %v295, %v291
      %v302 = vsel %vm298, %v297, %v293
      %303 = vrot.lane.b32.xlu0 %v198, 112
      %v304 = vpop.permute.xlu0 %303
      %305 = vrot.lane.b32.xlu0 %v200, 112
      %v306 = vpop.permute.xlu0 %305
      %307 = vrot.lane.b32.xlu0 %v199, 112
      %v308 = vpop.permute.xlu0 %307
      %309 = vrot.lane.b32.xlu0 %v201, 112
      %v310 = vpop.permute.xlu0 %309
      %vm311 = vcmp.lt.s32.totalorder %v203, 112
      %v312 = vsel %vm311, %v304, %v308
      %v313 = vsel %vm311, %v306, %v310
      %v314 = vsel %vm311, %v308, %v304
      %v315 = vsel %vm311, %v310, %v306
      %316 = vrot.lane.b32.xlu0 %v198, 111
      %v317 = vpop.permute.xlu0 %316
      %318 = vrot.lane.b32.xlu0 %v200, 111
      %v319 = vpop.permute.xlu0 %318
      %320 = vrot.lane.b32.xlu0 %v199, 111
      %v321 = vpop.permute.xlu0 %320
      %322 = vrot.lane.b32.xlu0 %v201, 111
      %v323 = vpop.permute.xlu0 %322
      %vm324 = vcmp.lt.s32.totalorder %v203, 111
      %v325 = vsel %vm324, %v317, %v321
      %v326 = vsel %vm324, %v319, %v323
      %v327 = vsel %vm324, %v321, %v317
      %v328 = vsel %vm324, %v323, %v319
      %v329 = vld [vmem:[%s1] sm:$0xff]
      %v330 = vld [vmem:[%s1 + $0x8] sm:$0xff]
      %v331 = vsel %vm217, %v236, 0.0
      %v332 = vsel %vm218, %v234, 0.0
      %v333 = vsel %vm217, %v237, 0.0
      %v334 = vsel %vm218, %v235, 0.0
      %336 = vset.pattern.permute.xlu0 0
      %337 = vperm.xlu0 %336, %v329
      %v338 = vpop.permute.xlu0 %337
      %341 = vset.pattern.permute.xlu0 0
      %342 = vperm.xlu0 %341, %v330
      %v343 = vpop.permute.xlu0 %342
      %v345 = vmul.f32 %v331, %v338
      %v346 = vmul.f32 %v332, %v338
      %v347 = vmul.f32 %v333, %v343
      %v348 = vmul.f32 %v334, %v343
      %v349 = vadd.f32 %v345, 0.0
      %v350 = vadd.f32 %v346, 0.0
      %v351 = vadd.f32 %v347, 0.0
      %v352 = vadd.f32 %v348, 0.0
      %v353 = vsel %vm209, %v249, 0.0
      %v354 = vsel %vm210, %v247, 0.0
      %v355 = vsel %vm209, %v250, 0.0
      %v356 = vsel %vm210, %v248, 0.0
      %357 = vset.pattern.permute.xlu0 1
      %358 = vperm.xlu0 %357, %v329
      %v359 = vpop.permute.xlu0 %358
      %361 = vset.pattern.permute.xlu0 1
      %362 = vperm.xlu0 %361, %v330
      %v363 = vpop.permute.xlu0 %362
      %v365 = vmul.f32 %v353, %v359
      %v366 = vmul.f32 %v354, %v359
      %v367 = vmul.f32 %v355, %v363
      %v368 = vmul.f32 %v356, %v363
      %v369 = vadd.f32 %v349, %v365
      %v370 = vadd.f32 %v350, %v366
      %v371 = vadd.f32 %v351, %v367
      %v372 = vadd.f32 %v352, %v368
      %v373 = vsel %vm219, %v262, 0.0
      %v374 = vsel %vm220, %v260, 0.0
      %v375 = vsel %vm219, %v263, 0.0
      %v376 = vsel %vm220, %v261, 0.0
      %377 = vset.pattern.permute.xlu0 2
      %378 = vperm.xlu0 %377, %v329
      %v379 = vpop.permute.xlu0 %378
      %381 = vset.pattern.permute.xlu0 2
      %382 = vperm.xlu0 %381, %v330
      %v383 = vpop.permute.xlu0 %382
      %v385 = vmul.f32 %v373, %v379
      %v386 = vmul.f32 %v374, %v379
      %v387 = vmul.f32 %v375, %v383
      %v388 = vmul.f32 %v376, %v383
      %v389 = vadd.f32 %v369, %v385
      %v390 = vadd.f32 %v370, %v386
      %v391 = vadd.f32 %v371, %v387
      %v392 = vadd.f32 %v372, %v388
      %v393 = vsel %vm213, %v275, 0.0
      %v394 = vsel %vm214, %v273, 0.0
      %v395 = vsel %vm213, %v276, 0.0
      %v396 = vsel %vm214, %v274, 0.0
      %397 = vset.pattern.permute.xlu0 3
      %398 = vperm.xlu0 %397, %v329
      %v399 = vpop.permute.xlu0 %398
      %401 = vset.pattern.permute.xlu0 3
      %402 = vperm.xlu0 %401, %v330
      %v403 = vpop.permute.xlu0 %402
      %v405 = vmul.f32 %v393, %v399
      %v406 = vmul.f32 %v394, %v399
      %v407 = vmul.f32 %v395, %v403
      %v408 = vmul.f32 %v396, %v403
      %v409 = vadd.f32 %v389, %v405
      %v410 = vadd.f32 %v390, %v406
      %v411 = vadd.f32 %v391, %v407
      %v412 = vadd.f32 %v392, %v408
      %413 = vset.pattern.permute.xlu0 4
      %414 = vperm.xlu0 %413, %v329
      %v415 = vpop.permute.xlu0 %414
      %417 = vset.pattern.permute.xlu0 4
      %418 = vperm.xlu0 %417, %v330
      %v419 = vpop.permute.xlu0 %418
      %v421 = vmul.f32 %v198, %v415
      %v422 = vmul.f32 %v199, %v415
      %v423 = vmul.f32 %v200, %v419
      %v424 = vmul.f32 %v201, %v419
      %v425 = vadd.f32 %v409, %v421
      %v426 = vadd.f32 %v410, %v422
      %v427 = vadd.f32 %v411, %v423
      %v428 = vadd.f32 %v412, %v424
      %v429 = vsel %vm215, %v286, 0.0
      %v430 = vsel %vm216, %v288, 0.0
      %v431 = vsel %vm215, %v287, 0.0
      %v432 = vsel %vm216, %v289, 0.0
      %433 = vset.pattern.permute.xlu0 5
      %434 = vperm.xlu0 %433, %v329
      %v435 = vpop.permute.xlu0 %434
      %437 = vset.pattern.permute.xlu0 5
      %438 = vperm.xlu0 %437, %v330
      %v439 = vpop.permute.xlu0 %438
      %v441 = vmul.f32 %v429, %v435
      %v442 = vmul.f32 %v430, %v435
      %v443 = vmul.f32 %v431, %v439
      %v444 = vmul.f32 %v432, %v439
      %v445 = vadd.f32 %v425, %v441
      %v446 = vadd.f32 %v426, %v442
      %v447 = vadd.f32 %v427, %v443
      %v448 = vadd.f32 %v428, %v444
      %v449 = vsel %vm221, %v299, 0.0
      %v450 = vsel %vm222, %v301, 0.0
      %v451 = vsel %vm221, %v300, 0.0
      %v452 = vsel %vm222, %v302, 0.0
      %453 = vset.pattern.permute.xlu0 6
      %454 = vperm.xlu0 %453, %v329
      %v455 = vpop.permute.xlu0 %454
      %457 = vset.pattern.permute.xlu0 6
      %458 = vperm.xlu0 %457, %v330
      %v459 = vpop.permute.xlu0 %458
      %v461 = vmul.f32 %v449, %v455
      %v462 = vmul.f32 %v450, %v455
      %v463 = vmul.f32 %v451, %v459
      %v464 = vmul.f32 %v452, %v459
      %v465 = vadd.f32 %v445, %v461
      %v466 = vadd.f32 %v446, %v462
      %v467 = vadd.f32 %v447, %v463
      %v468 = vadd.f32 %v448, %v464
      %v469 = vsel %vm211, %v312, 0.0
      %v470 = vsel %vm212, %v314, 0.0
      %v471 = vsel %vm211, %v313, 0.0
      %v472 = vsel %vm212, %v315, 0.0
      %473 = vset.pattern.permute.xlu0 7
      %474 = vperm.xlu0 %473, %v329
      %v475 = vpop.permute.xlu0 %474
      %477 = vset.pattern.permute.xlu0 7
      %478 = vperm.xlu0 %477, %v330
      %v479 = vpop.permute.xlu0 %478
      %v481 = vmul.f32 %v469, %v475
      %v482 = vmul.f32 %v470, %v475
      %v483 = vmul.f32 %v471, %v479
      %v484 = vmul.f32 %v472, %v479
      %v485 = vadd.f32 %v465, %v481
      %v486 = vadd.f32 %v466, %v482
      %v487 = vadd.f32 %v467, %v483
      %v488 = vadd.f32 %v468, %v484
      %v489 = vsel %vm223, %v325, 0.0
      %v490 = vsel %vm224, %v327, 0.0
      %v491 = vsel %vm223, %v326, 0.0
      %v492 = vsel %vm224, %v328, 0.0
      %493 = vset.pattern.permute.xlu0 8
      %494 = vperm.xlu0 %493, %v329
      %v495 = vpop.permute.xlu0 %494
      %497 = vset.pattern.permute.xlu0 8
      %498 = vperm.xlu0 %497, %v330
      %v499 = vpop.permute.xlu0 %498
      %v501 = vmul.f32 %v489, %v495
      %v502 = vmul.f32 %v490, %v495
      %v503 = vmul.f32 %v491, %v499
      %v504 = vmul.f32 %v492, %v499
      %v505 = vadd.f32 %v485, %v501
      %v506 = vadd.f32 %v486, %v502
      %v507 = vadd.f32 %v487, %v503
      %v508 = vadd.f32 %v488, %v504
      %v509 = vsel %vm213, %v275, -3.4028235e+38
      %v510 = vsel %vm214, %v273, -3.4028235e+38
      %v511 = vsel %vm213, %v276, -3.4028235e+38
      %v512 = vsel %vm214, %v274, -3.4028235e+38
      %v513 = vsel %vm215, %v286, -3.4028235e+38
      %v514 = vsel %vm216, %v288, -3.4028235e+38
      %v515 = vsel %vm215, %v287, -3.4028235e+38
      %v516 = vsel %vm216, %v289, -3.4028235e+38
      %v517 = vmax.f32 %v509, %v513
      %v518 = vmax.f32 %v510, %v514
      %v519 = vmax.f32 %v511, %v515
      %v520 = vmax.f32 %v512, %v516
      %v521 = vmax.f32 %v198, %v517
      %v522 = vmax.f32 %v199, %v518
      %v523 = vmax.f32 %v200, %v519
      %v524 = vmax.f32 %v201, %v520
      %525 = vrot.lane.b32.xlu0 %v521, 16
      %v526 = vpop.permute.xlu0 %525
      %527 = vrot.lane.b32.xlu0 %v523, 16
      %v528 = vpop.permute.xlu0 %527
      %529 = vrot.lane.b32.xlu0 %v522, 16
      %v530 = vpop.permute.xlu0 %529
      %531 = vrot.lane.b32.xlu0 %v524, 16
      %v532 = vpop.permute.xlu0 %531
      %v533 = vsel %vm246, %v526, %v530
      %v534 = vsel %vm246, %v528, %v532
      %v535 = vsel %vm246, %v530, %v526
      %v536 = vsel %vm246, %v532, %v528
      %v537 = vsel %vm209, %v535, -3.4028235e+38
      %v538 = vsel %vm210, %v533, -3.4028235e+38
      %v539 = vsel %vm209, %v536, -3.4028235e+38
      %v540 = vsel %vm210, %v534, -3.4028235e+38
      %541 = vrot.lane.b32.xlu0 %v521, 112
      %v542 = vpop.permute.xlu0 %541
      %543 = vrot.lane.b32.xlu0 %v523, 112
      %v544 = vpop.permute.xlu0 %543
      %545 = vrot.lane.b32.xlu0 %v522, 112
      %v546 = vpop.permute.xlu0 %545
      %547 = vrot.lane.b32.xlu0 %v524, 112
      %v548 = vpop.permute.xlu0 %547
      %v549 = vsel %vm311, %v542, %v546
      %v550 = vsel %vm311, %v544, %v548
      %v551 = vsel %vm311, %v546, %v542
      %v552 = vsel %vm311, %v548, %v544
      %v553 = vsel %vm211, %v549, -3.4028235e+38
      %v554 = vsel %vm212, %v551, -3.4028235e+38
      %v555 = vsel %vm211, %v550, -3.4028235e+38
      %v556 = vsel %vm212, %v552, -3.4028235e+38
      %v557 = vmax.f32 %v537, %v553
      %v558 = vmax.f32 %v538, %v554
      %v559 = vmax.f32 %v539, %v555
      %v560 = vmax.f32 %v540, %v556
      %v561 = vmax.f32 %v521, %v557
      %v562 = vmax.f32 %v522, %v558
      %v563 = vmax.f32 %v523, %v559
      %v564 = vmax.f32 %v524, %v560
      %v565 = vld [vmem:[%s2] sm:$0xff]
      %v566 = vld [vmem:[%s2 + $0x8] sm:$0xff]
      %v567 = vld [vmem:[%s3] sm:$0xff]
      %v568 = vld [vmem:[%s3 + $0x8] sm:$0xff]
      %570 = vset.pattern.permute.xlu0 0
      %571 = vperm.xlu0 %570, %v567
      %v572 = vpop.permute.xlu0 %571
      %575 = vset.pattern.permute.xlu0 0
      %576 = vperm.xlu0 %575, %v568
      %v577 = vpop.permute.xlu0 %576
      %vm579 = vcmask 130048
      %v581 = vsel %vm579, %v565, 0
      %v584 = vsel %vm579, %v566, 0
      %586 = vmatprep.subr.mxu0 0.0
      %587 = vmatpush1.msra.mxu0 0.0
      %588 = vmatprep.subr.mxu0 0.0
      %589 = vmatpush1.msra.mxu0 0.0
      %590 = vmatprep.subr.mxu0 0.0
      %591 = vmatpush1.msra.mxu0 0.0
      %592 = vmatprep.subr.mxu0 0.0
      %593 = vmatpush1.msra.mxu0 0.0
      %594 = vmatprep.subr.mxu0 0.0
      %595 = vmatpush1.msra.mxu0 0.0
      %596 = vmatprep.subr.mxu0 0.0
      %597 = vmatpush1.msra.mxu0 0.0
      %598 = vmatprep.subr.mxu0 0.0
      %599 = vmatpush1.msra.mxu0 0.0
      %600 = vmatprep.subr.mxu0 0.0
      %601 = vmatpush1.msra.mxu0 0.0
      %602 = vmatprep.subr.mxu0 0.0
      %603 = vmatpush1.msra.mxu0 0.0
      %604 = vmatprep.subr.mxu0 0.0
      %605 = vmatpush1.msra.mxu0 0.0
      %606 = vmatprep.subr.mxu0 0.0
      %607 = vmatpush1.msra.mxu0 0.0
      %608 = vmatprep.subr.mxu0 0.0
      %609 = vmatpush1.msra.mxu0 0.0
      %610 = vmatprep.subr.mxu0 0.0
      %611 = vmatpush1.msra.mxu0 0.0
      %612 = vmatprep.subr.mxu0 0.0
      %613 = vmatpush1.msra.mxu0 0.0
      %v614 = vand.u32 %v508, 4294901760
      %615 = vmatprep.subr.mxu0 %v614
      %v616 = vand.u32 %v507, 4294901760
      %617 = vmatpush1.msra.mxu0 %v616
      %v618 = vand.u32 %v506, 4294901760
      %619 = vmatprep.subr.mxu0 %v618
      %v620 = vand.u32 %v505, 4294901760
      %621 = vmatpush1.msra.mxu0 %v620
      %622 = vmatprep.subr.mxu0 0.0
      %623 = vmatpush2.msra.mxu0 0.0
      %624 = vmatprep.subr.mxu0 0.0
      %625 = vmatpush2.msra.mxu0 0.0
      %626 = vmatprep.subr.mxu0 0.0
      %627 = vmatpush2.msra.mxu0 0.0
      %628 = vmatprep.subr.mxu0 0.0
      %629 = vmatpush2.msra.mxu0 0.0
      %630 = vmatprep.subr.mxu0 0.0
      %631 = vmatpush2.msra.mxu0 0.0
      %632 = vmatprep.subr.mxu0 0.0
      %633 = vmatpush2.msra.mxu0 0.0
      %634 = vmatprep.subr.mxu0 0.0
      %635 = vmatpush2.msra.mxu0 0.0
      %636 = vmatprep.subr.mxu0 0.0
      %637 = vmatpush2.msra.mxu0 0.0
      %638 = vmatprep.subr.mxu0 0.0
      %639 = vmatpush2.msra.mxu0 0.0
      %640 = vmatprep.subr.mxu0 0.0
      %641 = vmatpush2.msra.mxu0 0.0
      %642 = vmatprep.subr.mxu0 0.0
      %643 = vmatpush2.msra.mxu0 0.0
      %644 = vmatprep.subr.mxu0 0.0
      %645 = vmatpush2.msra.mxu0 0.0
      %646 = vmatprep.subr.mxu0 0.0
      %647 = vmatpush2.msra.mxu0 0.0
      %648 = vmatprep.subr.mxu0 0.0
      %649 = vmatpush2.msra.mxu0 0.0
      %650 = vmatprep.subr.mxu0 0.0
      %651 = vmatpush2.msra.mxu0 0.0
      %652 = vmatprep.subr.mxu0 0.0
      %653 = vmatpush2.msra.mxu0 0.0
      %654 = vmatprep.mubr.f32.mxu0 0.0
      %v655 = vand.u32 %v581, 4294901760
      %v656 = vsub.f32 %v581, %v655
      %v657 = vand.u32 %v656, 4294901760
      %v658 = vsub.f32 %v656, %v657
      %v659 = vand.u32 %v658, 4294901760
      %660 = vmatmul.mubr.f32.gmra.mxu0 %v659
      %v661 = vpop.f32.mrf.mxu0
      %v662 = vadd.f32 %v572, %v661
      %v663 = vpop.f32.mrf.mxu0
      %v664 = vadd.f32 %v572, %v663
      %665 = vmatprep.mubr.f32.mxu0 0.0
      %v666 = vand.u32 %v584, 4294901760
      %v667 = vsub.f32 %v584, %v666
      %v668 = vand.u32 %v667, 4294901760
      %v669 = vsub.f32 %v667, %v668
      %v670 = vand.u32 %v669, 4294901760
      %671 = vmatmul.mubr.f32.gmra.mxu0 %v670
      %v672 = vpop.f32.mrf.mxu0
      %v673 = vadd.f32 %v577, %v672
      %v674 = vpop.f32.mrf.mxu0
      %v675 = vadd.f32 %v577, %v674
      %676 = vdwg.mxu0
      %677 = vmatprep.subr.mxu0 0.0
      %678 = vmatpush1.msra.mxu0 0.0
      %679 = vmatprep.subr.mxu0 0.0
      %680 = vmatpush1.msra.mxu0 0.0
      %681 = vmatprep.subr.mxu0 0.0
      %682 = vmatpush1.msra.mxu0 0.0
      %683 = vmatprep.subr.mxu0 0.0
      %684 = vmatpush1.msra.mxu0 0.0
      %685 = vmatprep.subr.mxu0 0.0
      %686 = vmatpush1.msra.mxu0 0.0
      %687 = vmatprep.subr.mxu0 0.0
      %688 = vmatpush1.msra.mxu0 0.0
      %689 = vmatprep.subr.mxu0 0.0
      %690 = vmatpush1.msra.mxu0 0.0
      %691 = vmatprep.subr.mxu0 0.0
      %692 = vmatpush1.msra.mxu0 0.0
      %693 = vmatprep.subr.mxu0 0.0
      %694 = vmatpush1.msra.mxu0 0.0
      %695 = vmatprep.subr.mxu0 0.0
      %696 = vmatpush1.msra.mxu0 0.0
      %697 = vmatprep.subr.mxu0 0.0
      %698 = vmatpush1.msra.mxu0 0.0
      %699 = vmatprep.subr.mxu0 0.0
      %700 = vmatpush1.msra.mxu0 0.0
      %701 = vmatprep.subr.mxu0 0.0
      %702 = vmatpush1.msra.mxu0 0.0
      %703 = vmatprep.subr.mxu0 0.0
      %704 = vmatpush1.msra.mxu0 0.0
      %v705 = vand.u32 %v508, 4294901760
      %v706 = vsub.f32 %v508, %v705
      %v707 = vand.u32 %v706, 4294901760
      %v708 = vsub.f32 %v706, %v707
      %v709 = vand.u32 %v708, 4294901760
      %710 = vmatprep.subr.mxu0 %v709
      %v711 = vand.u32 %v507, 4294901760
      %v712 = vsub.f32 %v507, %v711
      %v713 = vand.u32 %v712, 4294901760
      %v714 = vsub.f32 %v712, %v713
      %v715 = vand.u32 %v714, 4294901760
      %716 = vmatpush1.msra.mxu0 %v715
      %v717 = vand.u32 %v506, 4294901760
      %v718 = vsub.f32 %v506, %v717
      %v719 = vand.u32 %v718, 4294901760
      %v720 = vsub.f32 %v718, %v719
      %v721 = vand.u32 %v720, 4294901760
      %722 = vmatprep.subr.mxu0 %v721
      %v723 = vand.u32 %v505, 4294901760
      %v724 = vsub.f32 %v505, %v723
      %v725 = vand.u32 %v724, 4294901760
      %v726 = vsub.f32 %v724, %v725
      %v727 = vand.u32 %v726, 4294901760
      %728 = vmatpush1.msra.mxu0 %v727
      %729 = vmatprep.subr.mxu0 0.0
      %730 = vmatpush2.msra.mxu0 0.0
      %731 = vmatprep.subr.mxu0 0.0
      %732 = vmatpush2.msra.mxu0 0.0
      %733 = vmatprep.subr.mxu0 0.0
      %734 = vmatpush2.msra.mxu0 0.0
      %735 = vmatprep.subr.mxu0 0.0
      %736 = vmatpush2.msra.mxu0 0.0
      %737 = vmatprep.subr.mxu0 0.0
      %738 = vmatpush2.msra.mxu0 0.0
      %739 = vmatprep.subr.mxu0 0.0
      %740 = vmatpush2.msra.mxu0 0.0
      %741 = vmatprep.subr.mxu0 0.0
      %742 = vmatpush2.msra.mxu0 0.0
      %743 = vmatprep.subr.mxu0 0.0
      %744 = vmatpush2.msra.mxu0 0.0
      %745 = vmatprep.subr.mxu0 0.0
      %746 = vmatpush2.msra.mxu0 0.0
      %747 = vmatprep.subr.mxu0 0.0
      %748 = vmatpush2.msra.mxu0 0.0
      %749 = vmatprep.subr.mxu0 0.0
      %750 = vmatpush2.msra.mxu0 0.0
      %751 = vmatprep.subr.mxu0 0.0
      %752 = vmatpush2.msra.mxu0 0.0
      %753 = vmatprep.subr.mxu0 0.0
      %754 = vmatpush2.msra.mxu0 0.0
      %755 = vmatprep.subr.mxu0 0.0
      %756 = vmatpush2.msra.mxu0 0.0
      %757 = vmatprep.subr.mxu0 0.0
      %758 = vmatpush2.msra.mxu0 0.0
      %759 = vmatprep.subr.mxu0 0.0
      %760 = vmatpush2.msra.mxu0 0.0
      %761 = vmatprep.mubr.f32.mxu0 0.0
      %v762 = vand.u32 %v581, 4294901760
      %763 = vmatmul.mubr.f32.gmra.mxu0 %v762
      %v764 = vpop.f32.mrf.mxu0
      %v765 = vadd.f32 %v662, %v764
      %v766 = vpop.f32.mrf.mxu0
      %v767 = vadd.f32 %v664, %v766
      %768 = vmatprep.mubr.f32.mxu0 0.0
      %v769 = vand.u32 %v584, 4294901760
      %770 = vmatmul.mubr.f32.gmra.mxu0 %v769
      %v771 = vpop.f32.mrf.mxu0
      %v772 = vadd.f32 %v673, %v771
      %v773 = vpop.f32.mrf.mxu0
      %v774 = vadd.f32 %v675, %v773
      %775 = vdwg.mxu0
      %776 = vmatprep.subr.mxu0 0.0
      %777 = vmatpush1.msra.mxu0 0.0
      %778 = vmatprep.subr.mxu0 0.0
      %779 = vmatpush1.msra.mxu0 0.0
      %780 = vmatprep.subr.mxu0 0.0
      %781 = vmatpush1.msra.mxu0 0.0
      %782 = vmatprep.subr.mxu0 0.0
      %783 = vmatpush1.msra.mxu0 0.0
      %784 = vmatprep.subr.mxu0 0.0
      %785 = vmatpush1.msra.mxu0 0.0
      %786 = vmatprep.subr.mxu0 0.0
      %787 = vmatpush1.msra.mxu0 0.0
      %788 = vmatprep.subr.mxu0 0.0
      %789 = vmatpush1.msra.mxu0 0.0
      %790 = vmatprep.subr.mxu0 0.0
      %791 = vmatpush1.msra.mxu0 0.0
      %792 = vmatprep.subr.mxu0 0.0
      %793 = vmatpush1.msra.mxu0 0.0
      %794 = vmatprep.subr.mxu0 0.0
      %795 = vmatpush1.msra.mxu0 0.0
      %796 = vmatprep.subr.mxu0 0.0
      %797 = vmatpush1.msra.mxu0 0.0
      %798 = vmatprep.subr.mxu0 0.0
      %799 = vmatpush1.msra.mxu0 0.0
      %800 = vmatprep.subr.mxu0 0.0
      %801 = vmatpush1.msra.mxu0 0.0
      %802 = vmatprep.subr.mxu0 0.0
      %803 = vmatpush1.msra.mxu0 0.0
      %v804 = vand.u32 %v508, 4294901760
      %v805 = vsub.f32 %v508, %v804
      %806 = vmatprep.subr.mxu0 %v805
      %v807 = vand.u32 %v507, 4294901760
      %v808 = vsub.f32 %v507, %v807
      %809 = vmatpush1.msra.mxu0 %v808
      %v810 = vand.u32 %v506, 4294901760
      %v811 = vsub.f32 %v506, %v810
      %812 = vmatprep.subr.mxu0 %v811
      %v813 = vand.u32 %v505, 4294901760
      %v814 = vsub.f32 %v505, %v813
      %815 = vmatpush1.msra.mxu0 %v814
      %816 = vmatprep.subr.mxu0 0.0
      %817 = vmatpush2.msra.mxu0 0.0
      %818 = vmatprep.subr.mxu0 0.0
      %819 = vmatpush2.msra.mxu0 0.0
      %820 = vmatprep.subr.mxu0 0.0
      %821 = vmatpush2.msra.mxu0 0.0
      %822 = vmatprep.subr.mxu0 0.0
      %823 = vmatpush2.msra.mxu0 0.0
      %824 = vmatprep.subr.mxu0 0.0
      %825 = vmatpush2.msra.mxu0 0.0
      %826 = vmatprep.subr.mxu0 0.0
      %827 = vmatpush2.msra.mxu0 0.0
      %828 = vmatprep.subr.mxu0 0.0
      %829 = vmatpush2.msra.mxu0 0.0
      %830 = vmatprep.subr.mxu0 0.0
      %831 = vmatpush2.msra.mxu0 0.0
      %832 = vmatprep.subr.mxu0 0.0
      %833 = vmatpush2.msra.mxu0 0.0
      %834 = vmatprep.subr.mxu0 0.0
      %835 = vmatpush2.msra.mxu0 0.0
      %836 = vmatprep.subr.mxu0 0.0
      %837 = vmatpush2.msra.mxu0 0.0
      %838 = vmatprep.subr.mxu0 0.0
      %839 = vmatpush2.msra.mxu0 0.0
      %840 = vmatprep.subr.mxu0 0.0
      %841 = vmatpush2.msra.mxu0 0.0
      %842 = vmatprep.subr.mxu0 0.0
      %843 = vmatpush2.msra.mxu0 0.0
      %844 = vmatprep.subr.mxu0 0.0
      %845 = vmatpush2.msra.mxu0 0.0
      %846 = vmatprep.subr.mxu0 0.0
      %847 = vmatpush2.msra.mxu0 0.0
      %848 = vmatprep.mubr.f32.mxu0 0.0
      %v849 = vand.u32 %v581, 4294901760
      %v850 = vsub.f32 %v581, %v849
      %851 = vmatmul.mubr.f32.gmra.mxu0 %v850
      %v852 = vpop.f32.mrf.mxu0
      %v853 = vadd.f32 %v765, %v852
      %v854 = vpop.f32.mrf.mxu0
      %v855 = vadd.f32 %v767, %v854
      %856 = vmatprep.mubr.f32.mxu0 0.0
      %v857 = vand.u32 %v584, 4294901760
      %v858 = vsub.f32 %v584, %v857
      %859 = vmatmul.mubr.f32.gmra.mxu0 %v858
      %v860 = vpop.f32.mrf.mxu0
      %v861 = vadd.f32 %v772, %v860
      %v862 = vpop.f32.mrf.mxu0
      %v863 = vadd.f32 %v774, %v862
      %864 = vdwg.mxu0
      %865 = vmatprep.subr.mxu0 0.0
      %866 = vmatpush1.msra.mxu0 0.0
      %867 = vmatprep.subr.mxu0 0.0
      %868 = vmatpush1.msra.mxu0 0.0
      %869 = vmatprep.subr.mxu0 0.0
      %870 = vmatpush1.msra.mxu0 0.0
      %871 = vmatprep.subr.mxu0 0.0
      %872 = vmatpush1.msra.mxu0 0.0
      %873 = vmatprep.subr.mxu0 0.0
      %874 = vmatpush1.msra.mxu0 0.0
      %875 = vmatprep.subr.mxu0 0.0
      %876 = vmatpush1.msra.mxu0 0.0
      %877 = vmatprep.subr.mxu0 0.0
      %878 = vmatpush1.msra.mxu0 0.0
      %879 = vmatprep.subr.mxu0 0.0
      %880 = vmatpush1.msra.mxu0 0.0
      %881 = vmatprep.subr.mxu0 0.0
      %882 = vmatpush1.msra.mxu0 0.0
      %883 = vmatprep.subr.mxu0 0.0
      %884 = vmatpush1.msra.mxu0 0.0
      %885 = vmatprep.subr.mxu0 0.0
      %886 = vmatpush1.msra.mxu0 0.0
      %887 = vmatprep.subr.mxu0 0.0
      %888 = vmatpush1.msra.mxu0 0.0
      %889 = vmatprep.subr.mxu0 0.0
      %890 = vmatpush1.msra.mxu0 0.0
      %891 = vmatprep.subr.mxu0 0.0
      %892 = vmatpush1.msra.mxu0 0.0
      %v893 = vand.u32 %v508, 4294901760
      %894 = vmatprep.subr.mxu0 %v893
      %v895 = vand.u32 %v507, 4294901760
      %896 = vmatpush1.msra.mxu0 %v895
      %v897 = vand.u32 %v506, 4294901760
      %898 = vmatprep.subr.mxu0 %v897
      %v899 = vand.u32 %v505, 4294901760
      %900 = vmatpush1.msra.mxu0 %v899
      %901 = vmatprep.subr.mxu0 0.0
      %902 = vmatpush2.msra.mxu0 0.0
      %903 = vmatprep.subr.mxu0 0.0
      %904 = vmatpush2.msra.mxu0 0.0
      %905 = vmatprep.subr.mxu0 0.0
      %906 = vmatpush2.msra.mxu0 0.0
      %907 = vmatprep.subr.mxu0 0.0
      %908 = vmatpush2.msra.mxu0 0.0
      %909 = vmatprep.subr.mxu0 0.0
      %910 = vmatpush2.msra.mxu0 0.0
      %911 = vmatprep.subr.mxu0 0.0
      %912 = vmatpush2.msra.mxu0 0.0
      %913 = vmatprep.subr.mxu0 0.0
      %914 = vmatpush2.msra.mxu0 0.0
      %915 = vmatprep.subr.mxu0 0.0
      %916 = vmatpush2.msra.mxu0 0.0
      %917 = vmatprep.subr.mxu0 0.0
      %918 = vmatpush2.msra.mxu0 0.0
      %919 = vmatprep.subr.mxu0 0.0
      %920 = vmatpush2.msra.mxu0 0.0
      %921 = vmatprep.subr.mxu0 0.0
      %922 = vmatpush2.msra.mxu0 0.0
      %923 = vmatprep.subr.mxu0 0.0
      %924 = vmatpush2.msra.mxu0 0.0
      %925 = vmatprep.subr.mxu0 0.0
      %926 = vmatpush2.msra.mxu0 0.0
      %927 = vmatprep.subr.mxu0 0.0
      %928 = vmatpush2.msra.mxu0 0.0
      %929 = vmatprep.subr.mxu0 0.0
      %930 = vmatpush2.msra.mxu0 0.0
      %931 = vmatprep.subr.mxu0 0.0
      %932 = vmatpush2.msra.mxu0 0.0
      %933 = vmatprep.mubr.f32.mxu0 0.0
      %v934 = vand.u32 %v581, 4294901760
      %v935 = vsub.f32 %v581, %v934
      %v936 = vand.u32 %v935, 4294901760
      %937 = vmatmul.mubr.f32.gmra.mxu0 %v936
      %v938 = vpop.f32.mrf.mxu0
      %v939 = vadd.f32 %v853, %v938
      %v940 = vpop.f32.mrf.mxu0
      %v941 = vadd.f32 %v855, %v940
      %942 = vmatprep.mubr.f32.mxu0 0.0
      %v943 = vand.u32 %v584, 4294901760
      %v944 = vsub.f32 %v584, %v943
      %v945 = vand.u32 %v944, 4294901760
      %946 = vmatmul.mubr.f32.gmra.mxu0 %v945
      %v947 = vpop.f32.mrf.mxu0
      %v948 = vadd.f32 %v861, %v947
      %v949 = vpop.f32.mrf.mxu0
      %v950 = vadd.f32 %v863, %v949
      %951 = vdwg.mxu0
      %952 = vmatprep.subr.mxu0 0.0
      %953 = vmatpush1.msra.mxu0 0.0
      %954 = vmatprep.subr.mxu0 0.0
      %955 = vmatpush1.msra.mxu0 0.0
      %956 = vmatprep.subr.mxu0 0.0
      %957 = vmatpush1.msra.mxu0 0.0
      %958 = vmatprep.subr.mxu0 0.0
      %959 = vmatpush1.msra.mxu0 0.0
      %960 = vmatprep.subr.mxu0 0.0
      %961 = vmatpush1.msra.mxu0 0.0
      %962 = vmatprep.subr.mxu0 0.0
      %963 = vmatpush1.msra.mxu0 0.0
      %964 = vmatprep.subr.mxu0 0.0
      %965 = vmatpush1.msra.mxu0 0.0
      %966 = vmatprep.subr.mxu0 0.0
      %967 = vmatpush1.msra.mxu0 0.0
      %968 = vmatprep.subr.mxu0 0.0
      %969 = vmatpush1.msra.mxu0 0.0
      %970 = vmatprep.subr.mxu0 0.0
      %971 = vmatpush1.msra.mxu0 0.0
      %972 = vmatprep.subr.mxu0 0.0
      %973 = vmatpush1.msra.mxu0 0.0
      %974 = vmatprep.subr.mxu0 0.0
      %975 = vmatpush1.msra.mxu0 0.0
      %976 = vmatprep.subr.mxu0 0.0
      %977 = vmatpush1.msra.mxu0 0.0
      %978 = vmatprep.subr.mxu0 0.0
      %979 = vmatpush1.msra.mxu0 0.0
      %v980 = vand.u32 %v508, 4294901760
      %v981 = vsub.f32 %v508, %v980
      %v982 = vand.u32 %v981, 4294901760
      %983 = vmatprep.subr.mxu0 %v982
      %v984 = vand.u32 %v507, 4294901760
      %v985 = vsub.f32 %v507, %v984
      %v986 = vand.u32 %v985, 4294901760
      %987 = vmatpush1.msra.mxu0 %v986
      %v988 = vand.u32 %v506, 4294901760
      %v989 = vsub.f32 %v506, %v988
      %v990 = vand.u32 %v989, 4294901760
      %991 = vmatprep.subr.mxu0 %v990
      %v992 = vand.u32 %v505, 4294901760
      %v993 = vsub.f32 %v505, %v992
      %v994 = vand.u32 %v993, 4294901760
      %995 = vmatpush1.msra.mxu0 %v994
      %996 = vmatprep.subr.mxu0 0.0
      %997 = vmatpush2.msra.mxu0 0.0
      %998 = vmatprep.subr.mxu0 0.0
      %999 = vmatpush2.msra.mxu0 0.0
      %1000 = vmatprep.subr.mxu0 0.0
      %1001 = vmatpush2.msra.mxu0 0.0
      %1002 = vmatprep.subr.mxu0 0.0
      %1003 = vmatpush2.msra.mxu0 0.0
      %1004 = vmatprep.subr.mxu0 0.0
      %1005 = vmatpush2.msra.mxu0 0.0
      %1006 = vmatprep.subr.mxu0 0.0
      %1007 = vmatpush2.msra.mxu0 0.0
      %1008 = vmatprep.subr.mxu0 0.0
      %1009 = vmatpush2.msra.mxu0 0.0
      %1010 = vmatprep.subr.mxu0 0.0
      %1011 = vmatpush2.msra.mxu0 0.0
      %1012 = vmatprep.subr.mxu0 0.0
      %1013 = vmatpush2.msra.mxu0 0.0
      %1014 = vmatprep.subr.mxu0 0.0
      %1015 = vmatpush2.msra.mxu0 0.0
      %1016 = vmatprep.subr.mxu0 0.0
      %1017 = vmatpush2.msra.mxu0 0.0
      %1018 = vmatprep.subr.mxu0 0.0
      %1019 = vmatpush2.msra.mxu0 0.0
      %1020 = vmatprep.subr.mxu0 0.0
      %1021 = vmatpush2.msra.mxu0 0.0
      %1022 = vmatprep.subr.mxu0 0.0
      %1023 = vmatpush2.msra.mxu0 0.0
      %1024 = vmatprep.subr.mxu0 0.0
      %1025 = vmatpush2.msra.mxu0 0.0
      %1026 = vmatprep.subr.mxu0 0.0
      %1027 = vmatpush2.msra.mxu0 0.0
      %1028 = vmatprep.mubr.f32.mxu0 0.0
      %v1029 = vand.u32 %v581, 4294901760
      %1030 = vmatmul.mubr.f32.gmra.mxu0 %v1029
      %v1031 = vpop.f32.mrf.mxu0
      %v1032 = vadd.f32 %v939, %v1031
      %v1033 = vpop.f32.mrf.mxu0
      %v1034 = vadd.f32 %v941, %v1033
      %1035 = vmatprep.mubr.f32.mxu0 0.0
      %v1036 = vand.u32 %v584, 4294901760
      %1037 = vmatmul.mubr.f32.gmra.mxu0 %v1036
      %v1038 = vpop.f32.mrf.mxu0
      %v1039 = vadd.f32 %v948, %v1038
      %v1040 = vpop.f32.mrf.mxu0
      %v1041 = vadd.f32 %v950, %v1040
      %1042 = vdwg.mxu0
      %1043 = vmatprep.subr.mxu0 0.0
      %1044 = vmatpush1.msra.mxu0 0.0
      %1045 = vmatprep.subr.mxu0 0.0
      %1046 = vmatpush1.msra.mxu0 0.0
      %1047 = vmatprep.subr.mxu0 0.0
      %1048 = vmatpush1.msra.mxu0 0.0
      %1049 = vmatprep.subr.mxu0 0.0
      %1050 = vmatpush1.msra.mxu0 0.0
      %1051 = vmatprep.subr.mxu0 0.0
      %1052 = vmatpush1.msra.mxu0 0.0
      %1053 = vmatprep.subr.mxu0 0.0
      %1054 = vmatpush1.msra.mxu0 0.0
      %1055 = vmatprep.subr.mxu0 0.0
      %1056 = vmatpush1.msra.mxu0 0.0
      %1057 = vmatprep.subr.mxu0 0.0
      %1058 = vmatpush1.msra.mxu0 0.0
      %1059 = vmatprep.subr.mxu0 0.0
      %1060 = vmatpush1.msra.mxu0 0.0
      %1061 = vmatprep.subr.mxu0 0.0
      %1062 = vmatpush1.msra.mxu0 0.0
      %1063 = vmatprep.subr.mxu0 0.0
      %1064 = vmatpush1.msra.mxu0 0.0
      %1065 = vmatprep.subr.mxu0 0.0
      %1066 = vmatpush1.msra.mxu0 0.0
      %1067 = vmatprep.subr.mxu0 0.0
      %1068 = vmatpush1.msra.mxu0 0.0
      %1069 = vmatprep.subr.mxu0 0.0
      %1070 = vmatpush1.msra.mxu0 0.0
      %v1071 = vand.u32 %v508, 4294901760
      %1072 = vmatprep.subr.mxu0 %v1071
      %v1073 = vand.u32 %v507, 4294901760
      %1074 = vmatpush1.msra.mxu0 %v1073
      %v1075 = vand.u32 %v506, 4294901760
      %1076 = vmatprep.subr.mxu0 %v1075
      %v1077 = vand.u32 %v505, 4294901760
      %1078 = vmatpush1.msra.mxu0 %v1077
      %1079 = vmatprep.subr.mxu0 0.0
      %1080 = vmatpush2.msra.mxu0 0.0
      %1081 = vmatprep.subr.mxu0 0.0
      %1082 = vmatpush2.msra.mxu0 0.0
      %1083 = vmatprep.subr.mxu0 0.0
      %1084 = vmatpush2.msra.mxu0 0.0
      %1085 = vmatprep.subr.mxu0 0.0
      %1086 = vmatpush2.msra.mxu0 0.0
      %1087 = vmatprep.subr.mxu0 0.0
      %1088 = vmatpush2.msra.mxu0 0.0
      %1089 = vmatprep.subr.mxu0 0.0
      %1090 = vmatpush2.msra.mxu0 0.0
      %1091 = vmatprep.subr.mxu0 0.0
      %1092 = vmatpush2.msra.mxu0 0.0
      %1093 = vmatprep.subr.mxu0 0.0
      %1094 = vmatpush2.msra.mxu0 0.0
      %1095 = vmatprep.subr.mxu0 0.0
      %1096 = vmatpush2.msra.mxu0 0.0
      %1097 = vmatprep.subr.mxu0 0.0
      %1098 = vmatpush2.msra.mxu0 0.0
      %1099 = vmatprep.subr.mxu0 0.0
      %1100 = vmatpush2.msra.mxu0 0.0
      %1101 = vmatprep.subr.mxu0 0.0
      %1102 = vmatpush2.msra.mxu0 0.0
      %1103 = vmatprep.subr.mxu0 0.0
      %1104 = vmatpush2.msra.mxu0 0.0
      %1105 = vmatprep.subr.mxu0 0.0
      %1106 = vmatpush2.msra.mxu0 0.0
      %1107 = vmatprep.subr.mxu0 0.0
      %1108 = vmatpush2.msra.mxu0 0.0
      %1109 = vmatprep.subr.mxu0 0.0
      %1110 = vmatpush2.msra.mxu0 0.0
      %1111 = vmatprep.mubr.f32.mxu0 0.0
      %v1112 = vand.u32 %v581, 4294901760
      %1113 = vmatmul.mubr.f32.gmra.mxu0 %v1112
      %v1114 = vpop.f32.mrf.mxu0
      %v1115 = vadd.f32 %v1032, %v1114
      %v1116 = vpop.f32.mrf.mxu0
      %v1117 = vadd.f32 %v1034, %v1116
      %1118 = vmatprep.mubr.f32.mxu0 0.0
      %v1119 = vand.u32 %v584, 4294901760
      %1120 = vmatmul.mubr.f32.gmra.mxu0 %v1119
      %v1121 = vpop.f32.mrf.mxu0
      %v1122 = vadd.f32 %v1039, %v1121
      %v1123 = vpop.f32.mrf.mxu0
      %v1124 = vadd.f32 %v1041, %v1123
      %1125 = vdwg.mxu0
      %v1126 = vmax.f32 %v1115, 0.0
      %v1127 = vmax.f32 %v1117, 0.0
      %v1128 = vmax.f32 %v1122, 0.0
      %v1129 = vmax.f32 %v1124, 0.0
      %v1130 = vadd.f32 %v198, %v561
      %v1131 = vadd.f32 %v199, %v562
      %v1132 = vadd.f32 %v200, %v563
      %v1133 = vadd.f32 %v201, %v564
      %v1134 = vadd.f32 %v1130, %v1126
      %v1135 = vadd.f32 %v1131, %v1127
      %v1136 = vadd.f32 %v1132, %v1128
      %v1137 = vadd.f32 %v1133, %v1129
      %1138 = vst [vmem:[%s197] sm:$0xff] %v1134
      %1139 = vst [vmem:[%s197 + $0x8] sm:$0xff] %v1135
      %1140 = vst [vmem:[%s197 + $0x10] sm:$0xff] %v1136
      %1141 = vst [vmem:[%s197 + $0x18] sm:$0xff] %v1137
      %p1142 = scmp.lt.s32.totalorder %s15, 1
      %s1143 = scalar_select %p1142, %s15, 1
      %s1144 = smul.addr %s1143, 4
      %s1145 = smul.addr %s1144, 8
      %s1146 = scalar_lea.vmem %s4, %s1145
      // Predicated region
      $region37: #{motif_2_3_forward.1} parent=35 // pred_check
        %p1147 = pneg %p122
      $region38: #{motif_2_3_forward.1} parent=35 // pred_check_branch
        %1149 = sbr.rel (%p1147) target = $region40
      $region39: #{motif_2_3_forward.1} parent=35 // pred_region
        _
      $region40: #{motif_2_3_forward.1} parent=35 // pred_fallthru
        _
    $region36: #{motif_2_3_forward.1} parent=5 // pred_fallthru
      _
    %p1150 = scmp.le.s32.totalorder 2, %s10
    // Predicated region
    $region41: #{motif_2_3_forward.1} parent=5 // pred_check
      %p1151 = pneg %p1150
    $region42: #{motif_2_3_forward.1} parent=5 // pred_check_branch
      %1153 = sbr.rel (%p1151) target = $region44
    $region43: #{motif_2_3_forward.1} parent=5 // pred_region
      %s1154 = ssub.s32 %s10, 2
      // Predicated region
      $region45: #{motif_2_3_forward.1} parent=43 // pred_check
        %p1155 = pneg %p128
      $region46: #{motif_2_3_forward.1} parent=43 // pred_check_branch
        %1157 = sbr.rel (%p1155) target = $region48
      $region47: #{motif_2_3_forward.1} parent=43 // pred_region
        %p1158 = scmp.lt.s32.totalorder %s16, 1
        %s1159 = scalar_select %p1158, %s16, 1
        %s1160 = smul.addr %s1159, 4
        %s1161 = smul.addr %s1160, 8
        %s1162 = scalar_lea.vmem %s4, %s1161
      $region48: #{motif_2_3_forward.1} parent=43 // pred_fallthru
        _
    $region44: #{motif_2_3_forward.1} parent=5 // pred_fallthru
      _
  $region6: #{motif_2_3_forward.1} parent=0 // loop_footer
    %s14 = sadd.s32 1, %s10
  $region7: #{motif_2_3_forward.1} parent=0 // loop_footer_branch
    %9 = sbr.rel target = $region3
  $region8: #{motif_2_3_forward.1} parent=0 // loop_exit
    _

</llo_original>
